<compile_context>
chip_gen: v6e
topology: v6e:2x2x1
jax: 0.10.0
libtpu: 0.0.40
codegen_flags: <defaults>
</compile_context>

<pallas_src>
import jax
import jax.numpy as jnp
import numpy as np
from jax.experimental import pallas as pl
from jax.experimental.pallas import tpu as pltpu


def _round_up(x, m):
    return (x + m - 1) // m * m


def _gelu_exact(x):
    # nn.GELU() default = exact erf form.
    return 0.5 * x * (1.0 + jax.lax.erf(x * jnp.float32(0.7071067811865476)))


# --------------------------------------------------------------------------
# MLM head kernel: grid = (row_tiles, vocab_tiles)
# --------------------------------------------------------------------------
def mlm_head_kernel(
    pos_ref,                      # (TR, 1)  int32 flattened masked row indices
    h_ref,                        # (B*S, D) hidden states (resident; constant block)
    w_mlm_ref, b_mlm_ref,         # (D, D), (1, D)
    ln_g_ref, ln_b_ref,           # (1, D), (1, D)
    w_dec_ref, dec_b_ref,         # (D, TV), (1, TV)   streamed over V
    out_ref,                      # (TR, TV)
    z_ref,                        # VMEM scratch (TR, D) f32 — post-LN activations
):
    v = pl.program_id(1)

    @pl.when(v == 0)
    def _():
        n_rows = h_ref.shape[0]
        tr = pos_ref.shape[0]
        # One-hot gather on the MXU: (TR, B*S) @ (B*S, D) -> (TR, D).
        onehot = (jax.lax.broadcasted_iota(jnp.int32, (tr, n_rows), 1)
                  == pos_ref[...]).astype(jnp.float32)
        h_masked = jnp.dot(onehot, h_ref[...].astype(jnp.float32),
                           preferred_element_type=jnp.float32)

        # fc_mlm -> GELU -> LayerNorm(eps=1e-6)
        z = jnp.dot(h_masked, w_mlm_ref[...].astype(jnp.float32),
                    preferred_element_type=jnp.float32) + b_mlm_ref[...]
        z = _gelu_exact(z)
        mean = jnp.mean(z, axis=-1, keepdims=True)
        var = jnp.mean((z - mean) ** 2, axis=-1, keepdims=True)
        z = (z - mean) * jax.lax.rsqrt(var + jnp.float32(1e-6))
        z_ref[...] = z * ln_g_ref[...] + ln_b_ref[...]

    # Decoder tile: (TR, D) @ (D, TV) + bias — runs for every V tile.
    out_ref[...] = (
        jnp.dot(z_ref[...].astype(w_dec_ref.dtype), w_dec_ref[...],
                preferred_element_type=jnp.float32)
        + dec_b_ref[...]
    ).astype(out_ref.dtype)


# --------------------------------------------------------------------------
# NSP head kernel: one shot for all B rows, classifier lanes padded to 128.
# --------------------------------------------------------------------------
def nsp_head_kernel(h0_ref, w_nsp_ref, b_nsp_ref, w_cls_ref, b_cls_ref, out_ref):
    pooled = jnp.tanh(
        jnp.dot(h0_ref[...], w_nsp_ref[...], preferred_element_type=jnp.float32)
        + b_nsp_ref[...])
    out_ref[...] = (
        jnp.dot(pooled, w_cls_ref[...], preferred_element_type=jnp.float32)
        + b_cls_ref[...]
    ).astype(out_ref.dtype)


# --------------------------------------------------------------------------
# Wrappers
# --------------------------------------------------------------------------
def bert_lm_heads(h, masked_pos, params, *, row_tile=128, v_tile=512,
                  weights_dtype=None):
    """MLM + NSP heads via pallas_call.

    row_tile: rows of flattened (B*M) masked positions per grid step (mult of 8).
    v_tile:   vocab tile width (mult of 128).  Size per generation:
              ~2048 f32 on v7x (64 MiB VMEM), 4096-8192 on v5e/v6e.
    weights_dtype: e.g. jnp.bfloat16 to halve decoder-weight HBM traffic
              (accumulation stays f32).
    """
    assert row_tile % 8 == 0 and v_tile % 128 == 0
    B, S, D = h.shape
    M = masked_pos.shape[1]
    V = params["w_dec"].shape[1]

    # ---------------- MLM head ----------------
    h_flat = h.reshape(B * S, D)
    # Flatten masked positions across batch: row index = b*S + pos.
    flat_pos = (masked_pos.astype(jnp.int32)
                + jnp.arange(B, dtype=jnp.int32)[:, None] * S).reshape(-1)
    NR = B * M
    TR = min(row_tile, _round_up(NR, 8))
    NR_PAD = _round_up(NR, TR)
    flat_pos = jnp.pad(flat_pos, (0, NR_PAD - NR)).reshape(NR_PAD, 1)

    TV = min(v_tile, _round_up(V, 128))
    V_PAD = _round_up(V, TV)
    w_dec = params["w_dec"]
    dec_bias = params["dec_bias"]
    if V_PAD != V:
        w_dec = jnp.pad(w_dec, ((0, 0), (0, V_PAD - V)))
        dec_bias = jnp.pad(dec_bias, ((0, 0), (0, V_PAD - V)))
    if weights_dtype is not None:
        w_dec = w_dec.astype(weights_dtype)

    # TODO(synk): at very large B*S the resident (B*S, D) h block should itself be
    # replaced by an Element-indexed DMA of only the masked rows.
    grid = (NR_PAD // TR, V_PAD // TV)
    grid_spec = pltpu.PrefetchScalarGridSpec(
        num_scalar_prefetch=0,
        grid=grid,
        in_specs=[
            pl.BlockSpec((TR, 1), lambda r, v: (r, 0)),        # flat masked positions
            pl.BlockSpec((B * S, D), lambda r, v: (0, 0)),     # h (resident)
            pl.BlockSpec((D, D), lambda r, v: (0, 0)),         # w_mlm
            pl.BlockSpec((1, D), lambda r, v: (0, 0)),         # b_mlm
            pl.BlockSpec((1, D), lambda r, v: (0, 0)),         # ln gamma
            pl.BlockSpec((1, D), lambda r, v: (0, 0)),         # ln beta
            pl.BlockSpec((D, TV), lambda r, v: (0, v)),        # w_dec tile (streamed)
            pl.BlockSpec((1, TV), lambda r, v: (0, v)),        # decoder bias tile
        ],
        out_specs=pl.BlockSpec((TR, TV), lambda r, v: (r, v)),
        scratch_shapes=[pltpu.VMEM((TR, D), jnp.float32)],
    )
    logits_flat = pl.pallas_call(
        mlm_head_kernel,
        out_shape=jax.ShapeDtypeStruct((NR_PAD, V_PAD), jnp.float32),
        grid_spec=grid_spec,
        compiler_params=pltpu.CompilerParams(
            dimension_semantics=("parallel", "arbitrary"),
            vmem_limit_bytes=64 * 1024 * 1024),
    )(
        flat_pos, h_flat,
        params["w_mlm"], params["b_mlm"],
        params["ln_g"], params["ln_b"],
        w_dec, dec_bias,
    )
    logits_mlm = logits_flat[:NR, :V].reshape(B, M, V)

    # ---------------- NSP head ----------------
    B_PAD = _round_up(B, 8)
    C_PAD = 128  # pad classifier output lanes 2 -> 128 for unmasked stores
    h0 = jnp.pad(h[:, 0, :], ((0, B_PAD - B), (0, 0)))
    w_cls_pad = jnp.pad(params["w_cls"], ((0, 0), (0, C_PAD - 2)))
    b_cls_pad = jnp.pad(params["b_cls"], ((0, 0), (0, C_PAD - 2)))

    vmem_spec = pl.BlockSpec(memory_space=pltpu.MemorySpace.VMEM)
    nsp_padded = pl.pallas_call(
        nsp_head_kernel,
        out_shape=jax.ShapeDtypeStruct((B_PAD, C_PAD), jnp.float32),
        in_specs=[vmem_spec] * 5,
        out_specs=vmem_spec,
    )(h0, params["w_nsp"], params["b_nsp"], w_cls_pad, b_cls_pad)
    logits_nsp = nsp_padded[:B, :2]

    return logits_mlm, logits_nsp


def bert_lm_forward(input_ids, segment_ids, input_mask, masked_pos, params,
                    **kwargs):
    # TODO(synk): `self.bert = BERT` is not defined in the provided module; stand
    # in with a deterministic embedding sum (token + segment + position), masked.
    h = (params["tok_emb"][input_ids]
         + params["seg_emb"][segment_ids]
         + params["pos_emb"][None, :input_ids.shape[1], :])
    h = h * input_mask[..., None].astype(h.dtype)
    return bert_lm_heads(h, masked_pos, params, **kwargs)


def reference_forward(input_ids, segment_ids, input_mask, masked_pos, params):
    """Plain-JAX reference mirroring the PyTorch forward."""
    h = (params["tok_emb"][input_ids]
         + params["seg_emb"][segment_ids]
         + params["pos_emb"][None, :input_ids.shape[1], :])
    h = h * input_mask[..., None].astype(h.dtype)

    pooled = jnp.tanh(h[:, 0] @ params["w_nsp"] + params["b_nsp"][0])
    logits_nsp = pooled @ params["w_cls"] + params["b_cls"][0]

    h_masked = jnp.take_along_axis(h, masked_pos[:, :, None], axis=1)
    z = h_masked @ params["w_mlm"] + params["b_mlm"][0]
    z = _gelu_exact(z)
    mean = jnp.mean(z, axis=-1, keepdims=True)
    var = jnp.mean((z - mean) ** 2, axis=-1, keepdims=True)
    z = (z - mean) * jax.lax.rsqrt(var + 1e-6)
    z = z * params["ln_g"][0] + params["ln_b"][0]
    logits_mlm = z @ params["w_dec"] + params["dec_bias"][0]
    return logits_mlm, logits_nsp


if __name__ == "__main__":
    # Small shapes (V deliberately not a multiple of 128 to exercise padding,
    # row_tile/v_tile chosen so both grid axes have >1 tile).
    B, S, D, V, M, NSEG = 2, 16, 128, 250, 8, 2

    key = jax.random.PRNGKey(0)
    ks = jax.random.split(key, 12)
    scale = 0.02

    params = {
        # deterministic synthetic "BERT" embedding tables (backbone stand-in)
        "tok_emb": scale * jax.random.normal(ks[0], (V, D), jnp.float32),
        "seg_emb": scale * jax.random.normal(ks[1], (NSEG, D), jnp.float32),
        "pos_emb": scale * jax.random.normal(ks[2], (S, D), jnp.float32),
        # heads (PyTorch Linear weights pre-transposed to (in, out))
        "w_nsp": scale * jax.random.normal(ks[3], (D, D), jnp.float32),
        "b_nsp": scale * jax.random.normal(ks[4], (1, D), jnp.float32),
        "w_mlm": scale * jax.random.normal(ks[5], (D, D), jnp.float32),
        "b_mlm": scale * jax.random.normal(ks[6], (1, D), jnp.float32),
        "ln_g": jnp.ones((1, D), jnp.float32),
        "ln_b": jnp.zeros((1, D), jnp.float32),
        "w_cls": scale * jax.random.normal(ks[7], (D, 2), jnp.float32),
        "b_cls": scale * jax.random.normal(ks[8], (1, 2), jnp.float32),
        "w_dec": scale * jax.random.normal(ks[9], (D, V), jnp.float32),
        "dec_bias": jnp.zeros((1, V), jnp.float32),
    }

    input_ids = jax.random.randint(ks[10], (B, S), 0, V, dtype=jnp.int32)
    segment_ids = jnp.concatenate(
        [jnp.zeros((B, S // 2), jnp.int32), jnp.ones((B, S // 2), jnp.int32)],
        axis=1)
    input_mask = jnp.ones((B, S), jnp.float32)
    masked_pos = jax.random.randint(ks[11], (B, M), 0, S, dtype=jnp.int32)

    logits_mlm, logits_nsp = jax.block_until_ready(
        bert_lm_forward(input_ids, segment_ids, input_mask, masked_pos, params,
                        row_tile=8, v_tile=128, weights_dtype=None))

    ref_mlm, ref_nsp = reference_forward(
        input_ids, segment_ids, input_mask, masked_pos, params)

    np.testing.assert_allclose(np.asarray(logits_mlm), np.asarray(ref_mlm),
                               rtol=2e-2, atol=2e-3)
    np.testing.assert_allclose(np.asarray(logits_nsp), np.asarray(ref_nsp),
                               rtol=2e-2, atol=2e-3)
    print("KERNEL_OK")
</pallas_src>

<mosaic_0001>
module attributes {stable_mosaic.version = 11 : i64} {
  func.func @mlm_head_kernel(%arg0: i32, %arg1: i32, %arg2: memref<8x1xi32, #tpu.memory_space<vmem>>, %arg3: memref<32x128xf32, #tpu.memory_space<vmem>>, %arg4: memref<128x128xf32, #tpu.memory_space<vmem>>, %arg5: memref<1x128xf32, #tpu.memory_space<vmem>>, %arg6: memref<1x128xf32, #tpu.memory_space<vmem>>, %arg7: memref<1x128xf32, #tpu.memory_space<vmem>>, %arg8: memref<128x128xf32, #tpu.memory_space<vmem>>, %arg9: memref<1x128xf32, #tpu.memory_space<vmem>>, %arg10: memref<8x128xf32, #tpu.memory_space<vmem>>, %arg11: memref<8x128xf32, #tpu.memory_space<vmem>>) attributes {dimension_semantics = [#tpu.dimension_semantics<parallel>, #tpu.dimension_semantics<arbitrary>], iteration_bounds = array<i64: 2, 2>, scalar_prefetch = 0 : i64, scratch_operands = 1 : i64, tpu.core_type = #tpu.core_type<tc>, window_params = [{transform_indices = @transform_0, window_bounds = array<i64: 8, 1>}, {pipeline_mode = #tpu.pipeline_mode<synchronous>, transform_indices = @transform_1, window_bounds = array<i64: 32, 128>}, {pipeline_mode = #tpu.pipeline_mode<synchronous>, transform_indices = @transform_2, window_bounds = array<i64: 128, 128>}, {pipeline_mode = #tpu.pipeline_mode<synchronous>, transform_indices = @transform_3, window_bounds = array<i64: 1, 128>}, {pipeline_mode = #tpu.pipeline_mode<synchronous>, transform_indices = @transform_4, window_bounds = array<i64: 1, 128>}, {pipeline_mode = #tpu.pipeline_mode<synchronous>, transform_indices = @transform_5, window_bounds = array<i64: 1, 128>}, {transform_indices = @transform_6, window_bounds = array<i64: 128, 128>}, {transform_indices = @transform_7, window_bounds = array<i64: 1, 128>}, {transform_indices = @transform_8, window_bounds = array<i64: 8, 128>}]} {
    %c0_i32 = arith.constant 0 : i32
    %0 = arith.cmpi eq, %arg1, %c0_i32 : i32
    %1 = arith.extui %0 : i1 to i32
    %c0_i32_0 = arith.constant 0 : i32
    %2 = arith.cmpi ne, %1, %c0_i32_0 : i32
    scf.if %2 {
      %10 = tpu.iota {dimensions = array<i32: 1>} : vector<8x32xi32>
      %c0_8 = arith.constant 0 : index
      %c0_9 = arith.constant 0 : index
      %11 = vector.load %arg2[%c0_8, %c0_9] : memref<8x1xi32, #tpu.memory_space<vmem>>, vector<8x1xi32>
      %12 = vector.broadcast %11 : vector<8x1xi32> to vector<8x32xi32>
      %13 = arith.cmpi eq, %10, %12 : vector<8x32xi32>
      %14 = arith.extui %13 : vector<8x32xi1> to vector<8x32xi32>
      %15 = arith.sitofp %14 : vector<8x32xi32> to vector<8x32xf32>
      %c0_10 = arith.constant 0 : index
      %c0_11 = arith.constant 0 : index
      %16 = vector.load %arg3[%c0_10, %c0_11] : memref<32x128xf32, #tpu.memory_space<vmem>>, vector<32x128xf32>
      %cst_12 = arith.constant dense<0.000000e+00> : vector<8x128xf32>
      %17 = tpu.matmul %15, %16, %cst_12 {dimension_numbers = #tpu.dot_dimension_numbers<[1], [0], [0], [1], [0, 0, 1, 1], [], []>} : vector<8x32xf32>, vector<32x128xf32>, vector<8x128xf32> -> vector<8x128xf32>
      %c0_13 = arith.constant 0 : index
      %c0_14 = arith.constant 0 : index
      %18 = vector.load %arg4[%c0_13, %c0_14] : memref<128x128xf32, #tpu.memory_space<vmem>>, vector<128x128xf32>
      %cst_15 = arith.constant dense<0.000000e+00> : vector<8x128xf32>
      %19 = tpu.matmul %17, %18, %cst_15 {dimension_numbers = #tpu.dot_dimension_numbers<[1], [0], [0], [1], [0, 0, 1, 1], [], []>} : vector<8x128xf32>, vector<128x128xf32>, vector<8x128xf32> -> vector<8x128xf32>
      %c0_16 = arith.constant 0 : index
      %c0_17 = arith.constant 0 : index
      %20 = vector.load %arg5[%c0_16, %c0_17] : memref<1x128xf32, #tpu.memory_space<vmem>>, vector<1x128xf32>
      %21 = vector.broadcast %20 : vector<1x128xf32> to vector<8x128xf32>
      %22 = arith.addf %19, %21 : vector<8x128xf32>
      %cst_18 = arith.constant 5.000000e-01 : f32
      %23 = vector.broadcast %cst_18 : f32 to vector<8x128xf32>
      %24 = arith.mulf %23, %22 : vector<8x128xf32>
      %cst_19 = arith.constant 0.707106769 : f32
      %25 = vector.broadcast %cst_19 : f32 to vector<8x128xf32>
      %26 = arith.mulf %22, %25 : vector<8x128xf32>
      %27 = math.erf %26 : vector<8x128xf32>
      %cst_20 = arith.constant 1.000000e+00 : f32
      %28 = vector.broadcast %cst_20 : f32 to vector<8x128xf32>
      %29 = arith.addf %28, %27 : vector<8x128xf32>
      %30 = arith.mulf %24, %29 : vector<8x128xf32>
      %cst_21 = arith.constant dense<0.000000e+00> : vector<8xf32>
      %31 = vector.multi_reduction <add>, %30, %cst_21 [1] : vector<8x128xf32> to vector<8xf32>
      %32 = vector.shape_cast %31 : vector<8xf32> to vector<8x1xf32>
      %cst_22 = arith.constant 1.280000e+02 : f32
      %33 = vector.broadcast %cst_22 : f32 to vector<8x1xf32>
      %34 = arith.divf %32, %33 : vector<8x1xf32>
      %35 = vector.broadcast %34 : vector<8x1xf32> to vector<8x128xf32>
      %36 = arith.subf %30, %35 : vector<8x128xf32>
      %37 = arith.mulf %36, %36 : vector<8x128xf32>
      %cst_23 = arith.constant dense<0.000000e+00> : vector<8xf32>
      %38 = vector.multi_reduction <add>, %37, %cst_23 [1] : vector<8x128xf32> to vector<8xf32>
      %39 = vector.shape_cast %38 : vector<8xf32> to vector<8x1xf32>
      %cst_24 = arith.constant 1.280000e+02 : f32
      %40 = vector.broadcast %cst_24 : f32 to vector<8x1xf32>
      %41 = arith.divf %39, %40 : vector<8x1xf32>
      %42 = vector.broadcast %34 : vector<8x1xf32> to vector<8x128xf32>
      %43 = arith.subf %30, %42 : vector<8x128xf32>
      %cst_25 = arith.constant 9.99999997E-7 : f32
      %44 = vector.broadcast %cst_25 : f32 to vector<8x1xf32>
      %45 = arith.addf %41, %44 : vector<8x1xf32>
      %46 = math.rsqrt %45 : vector<8x1xf32>
      %47 = vector.broadcast %46 : vector<8x1xf32> to vector<8x128xf32>
      %48 = arith.mulf %43, %47 : vector<8x128xf32>
      %c0_26 = arith.constant 0 : index
      %c0_27 = arith.constant 0 : index
      %49 = vector.load %arg6[%c0_26, %c0_27] : memref<1x128xf32, #tpu.memory_space<vmem>>, vector<1x128xf32>
      %50 = vector.broadcast %49 : vector<1x128xf32> to vector<8x128xf32>
      %51 = arith.mulf %48, %50 : vector<8x128xf32>
      %c0_28 = arith.constant 0 : index
      %c0_29 = arith.constant 0 : index
      %52 = vector.load %arg7[%c0_28, %c0_29] : memref<1x128xf32, #tpu.memory_space<vmem>>, vector<1x128xf32>
      %53 = vector.broadcast %52 : vector<1x128xf32> to vector<8x128xf32>
      %54 = arith.addf %51, %53 : vector<8x128xf32>
      %c0_30 = arith.constant 0 : index
      %c0_31 = arith.constant 0 : index
      %55 = vector.load %arg11[%c0_30, %c0_31] : memref<8x128xf32, #tpu.memory_space<vmem>>, vector<8x128xf32>
      tpu.vector_store %arg11[%c0_30, %c0_31], %54 {strides = array<i32>} : memref<8x128xf32, #tpu.memory_space<vmem>>, vector<8x128xf32>,
    } else {
    }
    %c0 = arith.constant 0 : index
    %c0_1 = arith.constant 0 : index
    %3 = vector.load %arg11[%c0, %c0_1] : memref<8x128xf32, #tpu.memory_space<vmem>>, vector<8x128xf32>
    %c0_2 = arith.constant 0 : index
    %c0_3 = arith.constant 0 : index
    %4 = vector.load %arg8[%c0_2, %c0_3] : memref<128x128xf32, #tpu.memory_space<vmem>>, vector<128x128xf32>
    %cst = arith.constant dense<0.000000e+00> : vector<8x128xf32>
    %5 = tpu.matmul %3, %4, %cst {dimension_numbers = #tpu.dot_dimension_numbers<[1], [0], [0], [1], [0, 0, 1, 1], [], []>} : vector<8x128xf32>, vector<128x128xf32>, vector<8x128xf32> -> vector<8x128xf32>
    %c0_4 = arith.constant 0 : index
    %c0_5 = arith.constant 0 : index
    %6 = vector.load %arg9[%c0_4, %c0_5] : memref<1x128xf32, #tpu.memory_space<vmem>>, vector<1x128xf32>
    %7 = vector.broadcast %6 : vector<1x128xf32> to vector<8x128xf32>
    %8 = arith.addf %5, %7 : vector<8x128xf32>
    %c0_6 = arith.constant 0 : index
    %c0_7 = arith.constant 0 : index
    %9 = vector.load %arg10[%c0_6, %c0_7] : memref<8x128xf32, #tpu.memory_space<vmem>>, vector<8x128xf32>
    tpu.vector_store %arg10[%c0_6, %c0_7], %8 {strides = array<i32>} : memref<8x128xf32, #tpu.memory_space<vmem>>, vector<8x128xf32>,
    return
  }
  func.func @transform_0(%arg0: i32, %arg1: i32) -> (i32, i32) {
    %c0_i32 = arith.constant 0 : i32
    %c0_i32_0 = arith.constant 0 : i32
    return %arg0, %c0_i32 : i32, i32
  }
  func.func @transform_1(%arg0: i32, %arg1: i32) -> (i32, i32) {
    %c0_i32 = arith.constant 0 : i32
    %c0_i32_0 = arith.constant 0 : i32
    %c0_i32_1 = arith.constant 0 : i32
    return %c0_i32, %c0_i32_0 : i32, i32
  }
  func.func @transform_2(%arg0: i32, %arg1: i32) -> (i32, i32) {
    %c0_i32 = arith.constant 0 : i32
    %c0_i32_0 = arith.constant 0 : i32
    %c0_i32_1 = arith.constant 0 : i32
    return %c0_i32, %c0_i32_0 : i32, i32
  }
  func.func @transform_3(%arg0: i32, %arg1: i32) -> (i32, i32) {
    %c0_i32 = arith.constant 0 : i32
    %c0_i32_0 = arith.constant 0 : i32
    %c0_i32_1 = arith.constant 0 : i32
    return %c0_i32, %c0_i32_0 : i32, i32
  }
  func.func @transform_4(%arg0: i32, %arg1: i32) -> (i32, i32) {
    %c0_i32 = arith.constant 0 : i32
    %c0_i32_0 = arith.constant 0 : i32
    %c0_i32_1 = arith.constant 0 : i32
    return %c0_i32, %c0_i32_0 : i32, i32
  }
  func.func @transform_5(%arg0: i32, %arg1: i32) -> (i32, i32) {
    %c0_i32 = arith.constant 0 : i32
    %c0_i32_0 = arith.constant 0 : i32
    %c0_i32_1 = arith.constant 0 : i32
    return %c0_i32, %c0_i32_0 : i32, i32
  }
  func.func @transform_6(%arg0: i32, %arg1: i32) -> (i32, i32) {
    %c0_i32 = arith.constant 0 : i32
    %c0_i32_0 = arith.constant 0 : i32
    return %c0_i32, %arg1 : i32, i32
  }
  func.func @transform_7(%arg0: i32, %arg1: i32) -> (i32, i32) {
    %c0_i32 = arith.constant 0 : i32
    %c0_i32_0 = arith.constant 0 : i32
    return %c0_i32, %arg1 : i32, i32
  }
  func.func @transform_8(%arg0: i32, %arg1: i32) -> (i32, i32) {
    %c0_i32 = arith.constant 0 : i32
    return %arg0, %arg1 : i32, i32
  }
}

</mosaic_0001>

<llo_original>
// kernel: tpu_custom_call.1
$region0: #{tpu_custom_call.1}
  #allocation0 [shape = 'u32[]', space=smem, size = 0x4, offset = 0x4, fixed_abs, tag = 'smem constant byte address 0x4 - core index']
  #allocation1 [shape = 'u32[144,128]{1,0:T(1,128)}', space=vmem, size = 0x12000, scoped, tag = 'internal scratch']
  #allocation2 [shape = 'f32[8,128]{1,0:T(8,128)}', space=vmem, size = 0x1000, scoped, tag = 'scratch operand']
  %s0 = inlined_call_operand.vmem [shape: s32[16,1], index: 0, kind: input, shape index: {}]
  %s1 = inlined_call_operand.hbm [shape: f32[32,128], index: 1, kind: input, shape index: {}]
  %s2 = inlined_call_operand.hbm [shape: f32[128,128], index: 2, kind: input, shape index: {}]
  %s3 = inlined_call_operand.vmem [shape: f32[1,128], index: 3, kind: input, shape index: {}]
  %s4 = inlined_call_operand.vmem [shape: f32[1,128], index: 4, kind: input, shape index: {}]
  %s5 = inlined_call_operand.vmem [shape: f32[1,128], index: 5, kind: input, shape index: {}]
  %s6 = inlined_call_operand.hbm [shape: f32[128,256], index: 6, kind: input, shape index: {}]
  %s7 = inlined_call_operand.vmem [shape: f32[1,256], index: 7, kind: input, shape index: {}]
  %s8 = inlined_call_operand.hbm [shape: f32[16,256], index: 8, kind: output, shape index: {}]
  %s9 = sld [smem:[#allocation0]]
  $region81: #{tpu_custom_call.1} parent=0
    _
  %s11 = ssub.s32 1, %s9
  %s12 = scalar_select 0, %s11, %s9
  $region1: #{tpu_custom_call.1} parent=0
    #allocation3 [shape = 'u8[16384]{0}', space=vmem, size = 0x4000, scoped, tag = 'input window, operand 1, single buffered']
    #allocation4 [shape = 's32[2]{0}', space=sflag, size = 0x8, scoped, tag = 'scoped memory for tpu_custom_call.1']
    #allocation5 [shape = 's32[2]{0}', space=sflag, size = 0x8, scoped, tag = 'scoped memory for tpu_custom_call.1']
    #allocation6 [shape = 'u8[65536]{0}', space=vmem, size = 0x10000, scoped, tag = 'input window, operand 2, single buffered']
    #allocation7 [shape = 's32[1]{0}', space=sflag, size = 0x4, scoped, tag = 'scoped memory for tpu_custom_call.1']
    #allocation8 [shape = 'u8[131072]{0}', space=vmem, size = 0x20000, scoped, tag = 'input window, operand 6']
    #allocation9 [shape = 'u8[8192]{0}', space=vmem, size = 0x2000, scoped, tag = 'output window, operand 0']
    %13 = vsyncpa [#allocation4], 0
    %14 = vsyncpa [#allocation7], 0
    %15 = vsyncpa [#allocation5], 0
    %s16 = scalar_lea.sflag [#allocation5], 1
    %17 = vsyncpa %s16, 0
    loop: start=0, step=1, limit=6
    $region2: #{tpu_custom_call.1} parent=1 // loop_pre_header
      _
    $region3: #{tpu_custom_call.1} parent=1 // loop_header
      %s19 = sphi 0, %s23
      %p20 = scmp.ge.s32.totalorder %s19, 6
      %s26 = sphi 0, %s38
      %s27 = sphi 0, %s34
      %s28 = sphi 0, %s26
      %s29 = sphi 0, %s27
      %s30 = sphi 0, %s28
      %s31 = sphi 0, %s29
      %s41 = sphi 0, %s43
      %s44 = sphi 0, %s41
      %s45 = sphi 0, %s44
      %s61 = sphi 0, %s45
      %s65 = sphi 0, %s65
      %s67 = sphi 0, %s65
      %s68 = sphi 0, %s67
      %s82 = sphi 0, %s68
      %s86 = sphi 0, %s86
      %s88 = sphi 0, %s86
      %s89 = sphi 0, %s88
      %s103 = sphi 0, %s89
      %s107 = sphi 0, %s107
      %s109 = sphi 0, %s107
      %s110 = sphi 0, %s109
      %s124 = sphi 0, %s110
      %s128 = sphi 0, %s128
      %s130 = sphi 0, %s128
      %s131 = sphi 0, %s130
      %s145 = sphi 0, %s131
      %s149 = sphi 0, %s149
      %s151 = sphi 0, %s149
      %s152 = sphi 0, %s151
      %s166 = sphi 0, %s152
      %s172 = sphi 0, %s174
      %s175 = sphi 0, %s172
      %s176 = sphi 0, %s175
      %s192 = sphi 0, %s176
      %s198 = sphi 0, %s200
      %s201 = sphi 0, %s198
      %s202 = sphi 0, %s201
      %s218 = sphi 0, %s202
      %s226 = sphi 0, %s228
      %s229 = sphi 0, %s226
      %s230 = sphi 0, %s229
      %s246 = sphi 0, %s230
    $region4: #{tpu_custom_call.1} parent=1 // loop_header_branch
      %22 = sbr.rel (%p20) target = $region8
    $region5: #{tpu_custom_call.1} parent=1 // loop_body
      %s24 = ssub.s32 %s19, 1
      %s25 = ssub.s32 %s19, 2
      %s32 = sadd.s32 1, %s27
      %p33 = scmp.ge.s32.totalorder %s32, 2
      %s34 = scalar_select %p33, 0, %s32
      %s35 = sadd.s32 1, %s26
      %s36 = scalar_select %p33, %s35, %s26
      %p37 = scmp.ge.s32.totalorder %s36, 2
      %s38 = scalar_select %p37, 0, %s36
      %s39 = ssub.s32 %s26, %s38
      %p40 = scmp.eq.s32.totalorder %s39, 0
      %s42 = sadd.s32 %s41, 1
      %s43 = scalar_select %p40, %s41, %s42
      %p46 = pneg %p40
      %p47 = scmp.eq.s32.totalorder %s19, 3
      %p48 = por %p46, %p47
      %p49 = scmp.ne.s32.totalorder %s41, %s44
      %p50 = scmp.eq.s32.totalorder %s19, 0
      %p51 = por %p49, %p50
      %p52 = scmp.ne.s32.totalorder %s41, %s44
      %p53 = scmp.eq.s32.totalorder %s24, 3
      %p54 = por %p52, %p53
      %p55 = scmp.ne.s32.totalorder %s44, %s45
      %p56 = scmp.eq.s32.totalorder %s24, 0
      %p57 = por %p55, %p56
      %p58 = scmp.ne.s32.totalorder %s44, %s45
      %p59 = scmp.eq.s32.totalorder %s25, 3
      %p60 = por %p58, %p59
      %p62 = scmp.ne.s32.totalorder %s45, %s61
      %p63 = scmp.eq.s32.totalorder %s25, 0
      %p64 = por %p62, %p63
      %s66 = sadd.s32 %s65, 1
      %p69 = scmp.eq.s32.totalorder %s19, 3
      %p70 = scmp.ne.s32.totalorder %s65, %s67
      %p71 = scmp.eq.s32.totalorder %s19, 0
      %p72 = por %p70, %p71
      %p73 = scmp.ne.s32.totalorder %s65, %s67
      %p74 = scmp.eq.s32.totalorder %s24, 3
      %p75 = por %p73, %p74
      %p76 = scmp.ne.s32.totalorder %s67, %s68
      %p77 = scmp.eq.s32.totalorder %s24, 0
      %p78 = por %p76, %p77
      %p79 = scmp.ne.s32.totalorder %s67, %s68
      %p80 = scmp.eq.s32.totalorder %s25, 3
      %p81 = por %p79, %p80
      %p83 = scmp.ne.s32.totalorder %s68, %s82
      %p84 = scmp.eq.s32.totalorder %s25, 0
      %p85 = por %p83, %p84
      %s87 = sadd.s32 %s86, 1
      %p90 = scmp.eq.s32.totalorder %s19, 3
      %p91 = scmp.ne.s32.totalorder %s86, %s88
      %p92 = scmp.eq.s32.totalorder %s19, 0
      %p93 = por %p91, %p92
      %p94 = scmp.ne.s32.totalorder %s86, %s88
      %p95 = scmp.eq.s32.totalorder %s24, 3
      %p96 = por %p94, %p95
      %p97 = scmp.ne.s32.totalorder %s88, %s89
      %p98 = scmp.eq.s32.totalorder %s24, 0
      %p99 = por %p97, %p98
      %p100 = scmp.ne.s32.totalorder %s88, %s89
      %p101 = scmp.eq.s32.totalorder %s25, 3
      %p102 = por %p100, %p101
      %p104 = scmp.ne.s32.totalorder %s89, %s103
      %p105 = scmp.eq.s32.totalorder %s25, 0
      %p106 = por %p104, %p105
      %s108 = sadd.s32 %s107, 1
      %p111 = scmp.eq.s32.totalorder %s19, 3
      %p112 = scmp.ne.s32.totalorder %s107, %s109
      %p113 = scmp.eq.s32.totalorder %s19, 0
      %p114 = por %p112, %p113
      %p115 = scmp.ne.s32.totalorder %s107, %s109
      %p116 = scmp.eq.s32.totalorder %s24, 3
      %p117 = por %p115, %p116
      %p118 = scmp.ne.s32.totalorder %s109, %s110
      %p119 = scmp.eq.s32.totalorder %s24, 0
      %p120 = por %p118, %p119
      %p121 = scmp.ne.s32.totalorder %s109, %s110
      %p122 = scmp.eq.s32.totalorder %s25, 3
      %p123 = por %p121, %p122
      %p125 = scmp.ne.s32.totalorder %s110, %s124
      %p126 = scmp.eq.s32.totalorder %s25, 0
      %p127 = por %p125, %p126
      %s129 = sadd.s32 %s128, 1
      %p132 = scmp.eq.s32.totalorder %s19, 3
      %p133 = scmp.ne.s32.totalorder %s128, %s130
      %p134 = scmp.eq.s32.totalorder %s19, 0
      %p135 = por %p133, %p134
      %p136 = scmp.ne.s32.totalorder %s128, %s130
      %p137 = scmp.eq.s32.totalorder %s24, 3
      %p138 = por %p136, %p137
      %p139 = scmp.ne.s32.totalorder %s130, %s131
      %p140 = scmp.eq.s32.totalorder %s24, 0
      %p141 = por %p139, %p140
      %p142 = scmp.ne.s32.totalorder %s130, %s131
      %p143 = scmp.eq.s32.totalorder %s25, 3
      %p144 = por %p142, %p143
      %p146 = scmp.ne.s32.totalorder %s131, %s145
      %p147 = scmp.eq.s32.totalorder %s25, 0
      %p148 = por %p146, %p147
      %s150 = sadd.s32 %s149, 1
      %p153 = scmp.eq.s32.totalorder %s19, 3
      %p154 = scmp.ne.s32.totalorder %s149, %s151
      %p155 = scmp.eq.s32.totalorder %s19, 0
      %p156 = por %p154, %p155
      %p157 = scmp.ne.s32.totalorder %s149, %s151
      %p158 = scmp.eq.s32.totalorder %s24, 3
      %p159 = por %p157, %p158
      %p160 = scmp.ne.s32.totalorder %s151, %s152
      %p161 = scmp.eq.s32.totalorder %s24, 0
      %p162 = por %p160, %p161
      %p163 = scmp.ne.s32.totalorder %s151, %s152
      %p164 = scmp.eq.s32.totalorder %s25, 3
      %p165 = por %p163, %p164
      %p167 = scmp.ne.s32.totalorder %s152, %s166
      %p168 = scmp.eq.s32.totalorder %s25, 0
      %p169 = por %p167, %p168
      %s170 = ssub.s32 %s27, %s34
      %p171 = scmp.eq.s32.totalorder %s170, 0
      %s173 = sadd.s32 %s172, 1
      %s174 = scalar_select %p171, %s172, %s173
      %p177 = pneg %p171
      %p178 = scmp.eq.s32.totalorder %s19, 3
      %p179 = por %p177, %p178
      %p180 = scmp.ne.s32.totalorder %s172, %s175
      %p181 = scmp.eq.s32.totalorder %s19, 0
      %p182 = por %p180, %p181
      %p183 = scmp.ne.s32.totalorder %s172, %s175
      %p184 = scmp.eq.s32.totalorder %s24, 3
      %p185 = por %p183, %p184
      %p186 = scmp.ne.s32.totalorder %s175, %s176
      %p187 = scmp.eq.s32.totalorder %s24, 0
      %p188 = por %p186, %p187
      %p189 = scmp.ne.s32.totalorder %s175, %s176
      %p190 = scmp.eq.s32.totalorder %s25, 3
      %p191 = por %p189, %p190
      %p193 = scmp.ne.s32.totalorder %s176, %s192
      %p194 = scmp.eq.s32.totalorder %s25, 0
      %p195 = por %p193, %p194
      %s196 = ssub.s32 %s27, %s34
      %p197 = scmp.eq.s32.totalorder %s196, 0
      %s199 = sadd.s32 %s198, 1
      %s200 = scalar_select %p197, %s198, %s199
      %p203 = pneg %p197
      %p204 = scmp.eq.s32.totalorder %s19, 3
      %p205 = por %p203, %p204
      %p206 = scmp.ne.s32.totalorder %s198, %s201
      %p207 = scmp.eq.s32.totalorder %s19, 0
      %p208 = por %p206, %p207
      %p209 = scmp.ne.s32.totalorder %s198, %s201
      %p210 = scmp.eq.s32.totalorder %s24, 3
      %p211 = por %p209, %p210
      %p212 = scmp.ne.s32.totalorder %s201, %s202
      %p213 = scmp.eq.s32.totalorder %s24, 0
      %p214 = por %p212, %p213
      %p215 = scmp.ne.s32.totalorder %s201, %s202
      %p216 = scmp.eq.s32.totalorder %s25, 3
      %p217 = por %p215, %p216
      %p219 = scmp.ne.s32.totalorder %s202, %s218
      %p220 = scmp.eq.s32.totalorder %s25, 0
      %p221 = por %p219, %p220
      %s222 = ssub.s32 %s26, %s38
      %s223 = ssub.s32 %s27, %s34
      %s224 = sor.u32 %s222, %s223
      %p225 = scmp.eq.s32.totalorder %s224, 0
      %s227 = sadd.s32 %s226, 1
      %s228 = scalar_select %p225, %s226, %s227
      %p231 = pneg %p225
      %p232 = scmp.eq.s32.totalorder %s19, 3
      %p233 = por %p231, %p232
      %p234 = scmp.ne.s32.totalorder %s226, %s229
      %p235 = scmp.eq.s32.totalorder %s19, 0
      %p236 = por %p234, %p235
      %p237 = scmp.ne.s32.totalorder %s226, %s229
      %p238 = scmp.eq.s32.totalorder %s24, 3
      %p239 = por %p237, %p238
      %p240 = scmp.ne.s32.totalorder %s229, %s230
      %p241 = scmp.eq.s32.totalorder %s24, 0
      %p242 = por %p240, %p241
      %p243 = scmp.ne.s32.totalorder %s229, %s230
      %p244 = scmp.eq.s32.totalorder %s25, 3
      %p245 = por %p243, %p244
      %p247 = scmp.ne.s32.totalorder %s230, %s246
      %p248 = scmp.eq.s32.totalorder %s25, 0
      %p249 = por %p247, %p248
      %p250 = scmp.le.s32.totalorder 1, %s19
      %p251 = scmp.lt.s32.totalorder %s19, 5
      %p252 = pnand %p250, %p251
      %p253 = pneg %p252
      // Predicated region
      $region9: #{tpu_custom_call.1} parent=5 // pred_check
        _
      $region10: #{tpu_custom_call.1} parent=5 // pred_check_branch
        %255 = sbr.rel (%p252) target = $region12
      $region11: #{tpu_custom_call.1} parent=5 // pred_region
        %s256 = ssub.s32 %s19, 1
        // Predicated region
        $region13: #{tpu_custom_call.1} parent=11 // pred_check
          %p257 = pneg %p78
        $region14: #{tpu_custom_call.1} parent=11 // pred_check_branch
          %259 = sbr.rel (%p257) target = $region16
        $region15: #{tpu_custom_call.1} parent=11 // pred_region
          %s261 = ssub.s32 512, 512
          %262 = vsyncadd [#allocation4], %s261
          %s263 = sshll.u32 [#allocation3], 4
          %s264 = int_to_ptr.vmem [resolvable:$true] %s263
          %269 = dma.hbm_to_vmem [thread:$0]  %s1, 512, %s264, [#allocation4], 128, 128, 8
        $region16: #{tpu_custom_call.1} parent=11 // pred_fallthru
          _
        // Predicated region
        $region17: #{tpu_custom_call.1} parent=11 // pred_check
          %p270 = pneg %p99
        $region18: #{tpu_custom_call.1} parent=11 // pred_check_branch
          %272 = sbr.rel (%p270) target = $region20
        $region19: #{tpu_custom_call.1} parent=11 // pred_region
          %s274 = ssub.s32 2048, 2048
          %275 = vsyncadd [#allocation7], %s274
          %s276 = sshll.u32 [#allocation6], 4
          %s277 = int_to_ptr.vmem [resolvable:$true] %s276
          %282 = dma.hbm_to_vmem [thread:$0]  %s2, 2048, %s277, [#allocation7], 128, 128, 8
        $region20: #{tpu_custom_call.1} parent=11 // pred_fallthru
          _
        // Predicated region
        $region21: #{tpu_custom_call.1} parent=11 // pred_check
          %p283 = pneg %p120
        $region22: #{tpu_custom_call.1} parent=11 // pred_check_branch
          %285 = sbr.rel (%p283) target = $region24
        $region23: #{tpu_custom_call.1} parent=11 // pred_region
          _
        $region24: #{tpu_custom_call.1} parent=11 // pred_fallthru
          _
        // Predicated region
        $region25: #{tpu_custom_call.1} parent=11 // pred_check
          %p286 = pneg %p141
        $region26: #{tpu_custom_call.1} parent=11 // pred_check_branch
          %288 = sbr.rel (%p286) target = $region28
        $region27: #{tpu_custom_call.1} parent=11 // pred_region
          _
        $region28: #{tpu_custom_call.1} parent=11 // pred_fallthru
          _
        // Predicated region
        $region29: #{tpu_custom_call.1} parent=11 // pred_check
          %p289 = pneg %p162
        $region30: #{tpu_custom_call.1} parent=11 // pred_check_branch
          %291 = sbr.rel (%p289) target = $region32
        $region31: #{tpu_custom_call.1} parent=11 // pred_region
          _
        $region32: #{tpu_custom_call.1} parent=11 // pred_fallthru
          _
      $region12: #{tpu_custom_call.1} parent=5 // pred_fallthru
        _
      %p292 = scmp.lt.s32.totalorder %s19, 4
      // Predicated region
      $region33: #{tpu_custom_call.1} parent=5 // pred_check
        %p293 = pneg %p292
      $region34: #{tpu_custom_call.1} parent=5 // pred_check_branch
        %295 = sbr.rel (%p293) target = $region36
      $region35: #{tpu_custom_call.1} parent=5 // pred_region
        // Predicated region
        $region37: #{tpu_custom_call.1} parent=35 // pred_check
          %p296 = pneg %p51
        $region38: #{tpu_custom_call.1} parent=35 // pred_check_branch
          %298 = sbr.rel (%p296) target = $region40
        $region39: #{tpu_custom_call.1} parent=35 // pred_region
          %p299 = scmp.lt.s32.totalorder %s26, 1
          %s300 = scalar_select %p299, %s26, 1
          %s301 = smul.addr %s300, 8
          %s302 = scalar_lea.vmem %s0, %s301
        $region40: #{tpu_custom_call.1} parent=35 // pred_fallthru
          _
        // Predicated region
        $region41: #{tpu_custom_call.1} parent=35 // pred_check
          %p303 = pneg %p182
        $region42: #{tpu_custom_call.1} parent=35 // pred_check_branch
          %305 = sbr.rel (%p303) target = $region44
        $region43: #{tpu_custom_call.1} parent=35 // pred_region
          %s306 = sand.u32 %s19, 1
          %s307 = scalar_lea.sflag [#allocation4], %s306
          %s308 = sand.u32 %s172, 1
          %s309 = smul.addr %s308, 128
          %s310 = scalar_lea.vmem [#allocation8], %s309
          %s312 = ssub.s32 2048, 2048
          %313 = vsyncadd %s307, %s312
          %s314 = smul.addr %s27, 128
          %s315 = scalar_lea.hbm %s6, %s314
          %s316 = sshll.u32 %s310, 4
          %s317 = int_to_ptr.vmem [resolvable:$true] %s316
          %322 = dma.hbm_to_vmem [thread:$0]  %s315, 2048, %s317, %s307, 256, 128, 8
        $region44: #{tpu_custom_call.1} parent=35 // pred_fallthru
          _
        // Predicated region
        $region45: #{tpu_custom_call.1} parent=35 // pred_check
          %p323 = pneg %p208
        $region46: #{tpu_custom_call.1} parent=35 // pred_check_branch
          %325 = sbr.rel (%p323) target = $region48
        $region47: #{tpu_custom_call.1} parent=35 // pred_region
          %p326 = scmp.lt.s32.totalorder %s27, 1
          %s327 = scalar_select %p326, %s27, 1
          %s328 = scalar_lea.vmem %s7, %s327
        $region48: #{tpu_custom_call.1} parent=35 // pred_fallthru
          _
      $region36: #{tpu_custom_call.1} parent=5 // pred_fallthru
        _
      %p329 = scmp.le.s32.totalorder 1, %s19
      %p330 = scmp.lt.s32.totalorder %s19, 5
      %p331 = pnand %p329, %p330
      %p332 = pneg %p331
      // Predicated region
      $region49: #{tpu_custom_call.1} parent=5 // pred_check
        _
      $region50: #{tpu_custom_call.1} parent=5 // pred_check_branch
        %334 = sbr.rel (%p331) target = $region52
      $region51: #{tpu_custom_call.1} parent=5 // pred_region
        %s335 = ssub.s32 %s19, 1
        // Predicated region
        $region53: #{tpu_custom_call.1} parent=51 // pred_check
          %p336 = pneg %p78
        $region54: #{tpu_custom_call.1} parent=51 // pred_check_branch
          %338 = sbr.rel (%p336) target = $region56
        $region55: #{tpu_custom_call.1} parent=51 // pred_region
          %339 = dma.done [#allocation4], 512
        $region56: #{tpu_custom_call.1} parent=51 // pred_fallthru
          _
        // Predicated region
        $region57: #{tpu_custom_call.1} parent=51 // pred_check
          %p340 = pneg %p99
        $region58: #{tpu_custom_call.1} parent=51 // pred_check_branch
          %342 = sbr.rel (%p340) target = $region60
        $region59: #{tpu_custom_call.1} parent=51 // pred_region
          %343 = dma.done [#allocation7], 2048
        $region60: #{tpu_custom_call.1} parent=51 // pred_fallthru
          _
        %s344 = sand.u32 %s24, 1
        %s345 = scalar_lea.sflag [#allocation4], %s344
        %s346 = sand.u32 %s175, 1
        %s347 = smul.addr %s346, 128
        %s348 = scalar_lea.vmem [#allocation8], %s347
        // Predicated region
        $region61: #{tpu_custom_call.1} parent=51 // pred_check
          %p349 = pneg %p188
        $region62: #{tpu_custom_call.1} parent=51 // pred_check_branch
          %351 = sbr.rel (%p349) target = $region64
        $region63: #{tpu_custom_call.1} parent=51 // pred_region
          %352 = dma.done %s345, 2048
        $region64: #{tpu_custom_call.1} parent=51 // pred_fallthru
          _
        %p353 = scmp.lt.s32.totalorder %s28, 1
        %s354 = scalar_select %p353, %s28, 1
        %s355 = smul.addr %s354, 8
        %s356 = scalar_lea.vmem %s0, %s355
        %p357 = pneg %p57
        %p358 = pneg %p54
        %p359 = pneg %p78
        %p360 = pneg %p75
        %p361 = pneg %p99
        %p362 = pneg %p96
        %p363 = pneg %p120
        %p364 = pneg %p117
        %p365 = pneg %p141
        %p366 = pneg %p138
        %p367 = pneg %p162
        %p368 = pneg %p159
        %s369 = sand.u32 %s24, 1
        %s370 = scalar_lea.sflag [#allocation4], %s369
        %s371 = sand.u32 %s175, 1
        %s372 = smul.addr %s371, 128
        %s373 = scalar_lea.vmem [#allocation8], %s372
        %p374 = pneg %p188
        %p375 = pneg %p185
        %p376 = scmp.lt.s32.totalorder %s29, 1
        %s377 = scalar_select %p376, %s29, 1
        %s378 = scalar_lea.vmem %s7, %s377
        %p379 = pneg %p214
        %p380 = pneg %p211
        %p381 = pneg %p242
        %p382 = pneg %p239
        %s383 = sand.u32 %s229, 1
        %s384 = scalar_lea.sflag [#allocation5], %s383
        %s385 = sand.u32 %s229, 1
        %s386 = smul.addr %s385, 8
        %s387 = scalar_lea.vmem [#allocation9], %s386
        %p388 = scmp.lt.s32.totalorder %s28, 1
        %s389 = scalar_select %p388, %s28, 1
        %s390 = smul.addr %s389, 8
        %s391 = scalar_lea.vmem %s0, %s390
        %p392 = scmp.lt.s32.totalorder %s29, 1
        %s393 = scalar_select %p392, %s29, 1
        %s394 = scalar_lea.vmem %s7, %s393
        %p395 = scmp.eq.s32.totalorder %s29, 0
        // Predicated region
        $region65: #{tpu_custom_call.1} parent=51 // pred_check
          %p396 = pneg %p395
        $region66: #{tpu_custom_call.1} parent=51 // pred_check_branch
          %398 = sbr.rel (%p396) target = $region68
        $region67: #{tpu_custom_call.1} parent=51 // pred_region
          %v399 = vlaneseq
          %v400 = vand.u32 %v399, 127
          %v401 = vld [vmem:[%s391] sm:$0xff]
          %402 = vset.pattern.permute.xlu0 0
          %403 = vperm.xlu0 %402, %v401
          %v404 = vpop.permute.xlu0 %403
          %vm405 = vcmp.eq.s32.totalorder %v400, %v404
          %v406 = vsel %vm405, 1, 0
          %v407 = vcvt.s32.f32 %v406
          %v408 = vld [vmem:[#allocation3] sm:$0xff]
          %v409 = vld [vmem:[#allocation3 + $0x8] sm:$0xff]
          %v410 = vld [vmem:[#allocation3 + $0x10] sm:$0xff]
          %v411 = vld [vmem:[#allocation3 + $0x18] sm:$0xff]
          %vm412 = vcmask 261120
          %v414 = vsel %vm412, %v407, 0
          %416 = vmatprep.subr.mxu0 0.0
          %417 = vmatpush1.msra.mxu0 0.0
          %418 = vmatprep.subr.mxu0 0.0
          %419 = vmatpush1.msra.mxu0 0.0
          %420 = vmatprep.subr.mxu0 0.0
          %421 = vmatpush1.msra.mxu0 0.0
          %422 = vmatprep.subr.mxu0 0.0
          %423 = vmatpush1.msra.mxu0 0.0
          %424 = vmatprep.subr.mxu0 0.0
          %425 = vmatpush1.msra.mxu0 0.0
          %426 = vmatprep.subr.mxu0 0.0
          %427 = vmatpush1.msra.mxu0 0.0
          %428 = vmatprep.subr.mxu0 0.0
          %429 = vmatpush1.msra.mxu0 0.0
          %430 = vmatprep.subr.mxu0 0.0
          %431 = vmatpush1.msra.mxu0 0.0
          %432 = vmatprep.subr.mxu0 0.0
          %433 = vmatpush1.msra.mxu0 0.0
          %434 = vmatprep.subr.mxu0 0.0
          %435 = vmatpush1.msra.mxu0 0.0
          %436 = vmatprep.subr.mxu0 0.0
          %437 = vmatpush1.msra.mxu0 0.0
          %438 = vmatprep.subr.mxu0 0.0
          %439 = vmatpush1.msra.mxu0 0.0
          %440 = vmatprep.subr.mxu0 0.0
          %441 = vmatpush1.msra.mxu0 %v411
          %442 = vmatprep.subr.mxu0 0.0
          %443 = vmatpush1.msra.mxu0 %v410
          %444 = vmatprep.subr.mxu0 0.0
          %445 = vmatpush1.msra.mxu0 %v409
          %446 = vmatprep.subr.mxu0 0.0
          %447 = vmatpush1.msra.mxu0 %v408
          %448 = vmatprep.subr.mxu0 0.0
          %449 = vmatpush2.msra.mxu0 0.0
          %450 = vmatprep.subr.mxu0 0.0
          %451 = vmatpush2.msra.mxu0 0.0
          %452 = vmatprep.subr.mxu0 0.0
          %453 = vmatpush2.msra.mxu0 0.0
          %454 = vmatprep.subr.mxu0 0.0
          %455 = vmatpush2.msra.mxu0 0.0
          %456 = vmatprep.subr.mxu0 0.0
          %457 = vmatpush2.msra.mxu0 0.0
          %458 = vmatprep.subr.mxu0 0.0
          %459 = vmatpush2.msra.mxu0 0.0
          %460 = vmatprep.subr.mxu0 0.0
          %461 = vmatpush2.msra.mxu0 0.0
          %462 = vmatprep.subr.mxu0 0.0
          %463 = vmatpush2.msra.mxu0 0.0
          %464 = vmatprep.subr.mxu0 0.0
          %465 = vmatpush2.msra.mxu0 0.0
          %466 = vmatprep.subr.mxu0 0.0
          %467 = vmatpush2.msra.mxu0 0.0
          %468 = vmatprep.subr.mxu0 0.0
          %469 = vmatpush2.msra.mxu0 0.0
          %470 = vmatprep.subr.mxu0 0.0
          %471 = vmatpush2.msra.mxu0 0.0
          %472 = vmatprep.subr.mxu0 0.0
          %473 = vmatpush2.msra.mxu0 0.0
          %474 = vmatprep.subr.mxu0 0.0
          %475 = vmatpush2.msra.mxu0 0.0
          %476 = vmatprep.subr.mxu0 0.0
          %477 = vmatpush2.msra.mxu0 0.0
          %478 = vmatprep.subr.mxu0 0.0
          %479 = vmatpush2.msra.mxu0 0.0
          %480 = vmatprep.mubr.f32.mxu0 0.0
          %481 = vmatmul.mubr.f32.gmra.mxu0 %v414
          %v482 = vpop.f32.mrf.mxu0
          %v483 = vadd.f32 0.0, %v482
          %v484 = vpop.f32.mrf.mxu0
          %485 = vdwg.mxu0
          %v486 = vld [vmem:[#allocation6] sm:$0xff]
          %v487 = vld [vmem:[#allocation6 + $0x8] sm:$0xff]
          %v488 = vld [vmem:[#allocation6 + $0x10] sm:$0xff]
          %v489 = vld [vmem:[#allocation6 + $0x18] sm:$0xff]
          %v490 = vld [vmem:[#allocation6 + $0x20] sm:$0xff]
          %v491 = vld [vmem:[#allocation6 + $0x28] sm:$0xff]
          %v492 = vld [vmem:[#allocation6 + $0x30] sm:$0xff]
          %v493 = vld [vmem:[#allocation6 + $0x38] sm:$0xff]
          %v494 = vld [vmem:[#allocation6 + $0x40] sm:$0xff]
          %v495 = vld [vmem:[#allocation6 + $0x48] sm:$0xff]
          %v496 = vld [vmem:[#allocation6 + $0x50] sm:$0xff]
          %v497 = vld [vmem:[#allocation6 + $0x58] sm:$0xff]
          %v498 = vld [vmem:[#allocation6 + $0x60] sm:$0xff]
          %v499 = vld [vmem:[#allocation6 + $0x68] sm:$0xff]
          %v500 = vld [vmem:[#allocation6 + $0x70] sm:$0xff]
          %v501 = vld [vmem:[#allocation6 + $0x78] sm:$0xff]
          %v502 = vld [vmem:[%s3] sm:$0x1]
          %v504 = vlaneseq
          %v505 = vshrl.u32 %v504, 7
          %v506 = vsub.s32 0, %v505
          %v507 = vrot.slane %v502, %v506
          %509 = vmatprep.subr.mxu0 0.0
          %510 = vmatpush1.msra.mxu0 %v501
          %511 = vmatprep.subr.mxu0 0.0
          %512 = vmatpush1.msra.mxu0 %v500
          %513 = vmatprep.subr.mxu0 0.0
          %514 = vmatpush1.msra.mxu0 %v499
          %515 = vmatprep.subr.mxu0 0.0
          %516 = vmatpush1.msra.mxu0 %v498
          %517 = vmatprep.subr.mxu0 0.0
          %518 = vmatpush1.msra.mxu0 %v497
          %519 = vmatprep.subr.mxu0 0.0
          %520 = vmatpush1.msra.mxu0 %v496
          %521 = vmatprep.subr.mxu0 0.0
          %522 = vmatpush1.msra.mxu0 %v495
          %523 = vmatprep.subr.mxu0 0.0
          %524 = vmatpush1.msra.mxu0 %v494
          %525 = vmatprep.subr.mxu0 0.0
          %526 = vmatpush1.msra.mxu0 %v493
          %527 = vmatprep.subr.mxu0 0.0
          %528 = vmatpush1.msra.mxu0 %v492
          %529 = vmatprep.subr.mxu0 0.0
          %530 = vmatpush1.msra.mxu0 %v491
          %531 = vmatprep.subr.mxu0 0.0
          %532 = vmatpush1.msra.mxu0 %v490
          %533 = vmatprep.subr.mxu0 0.0
          %534 = vmatpush1.msra.mxu0 %v489
          %535 = vmatprep.subr.mxu0 0.0
          %536 = vmatpush1.msra.mxu0 %v488
          %537 = vmatprep.subr.mxu0 0.0
          %538 = vmatpush1.msra.mxu0 %v487
          %539 = vmatprep.subr.mxu0 0.0
          %540 = vmatpush1.msra.mxu0 %v486
          %541 = vmatprep.subr.mxu0 0.0
          %542 = vmatpush2.msra.mxu0 0.0
          %543 = vmatprep.subr.mxu0 0.0
          %544 = vmatpush2.msra.mxu0 0.0
          %545 = vmatprep.subr.mxu0 0.0
          %546 = vmatpush2.msra.mxu0 0.0
          %547 = vmatprep.subr.mxu0 0.0
          %548 = vmatpush2.msra.mxu0 0.0
          %549 = vmatprep.subr.mxu0 0.0
          %550 = vmatpush2.msra.mxu0 0.0
          %551 = vmatprep.subr.mxu0 0.0
          %552 = vmatpush2.msra.mxu0 0.0
          %553 = vmatprep.subr.mxu0 0.0
          %554 = vmatpush2.msra.mxu0 0.0
          %555 = vmatprep.subr.mxu0 0.0
          %556 = vmatpush2.msra.mxu0 0.0
          %557 = vmatprep.subr.mxu0 0.0
          %558 = vmatpush2.msra.mxu0 0.0
          %559 = vmatprep.subr.mxu0 0.0
          %560 = vmatpush2.msra.mxu0 0.0
          %561 = vmatprep.subr.mxu0 0.0
          %562 = vmatpush2.msra.mxu0 0.0
          %563 = vmatprep.subr.mxu0 0.0
          %564 = vmatpush2.msra.mxu0 0.0
          %565 = vmatprep.subr.mxu0 0.0
          %566 = vmatpush2.msra.mxu0 0.0
          %567 = vmatprep.subr.mxu0 0.0
          %568 = vmatpush2.msra.mxu0 0.0
          %569 = vmatprep.subr.mxu0 0.0
          %570 = vmatpush2.msra.mxu0 0.0
          %571 = vmatprep.subr.mxu0 0.0
          %572 = vmatpush2.msra.mxu0 0.0
          %573 = vmatprep.mubr.f32.mxu0 0.0
          %574 = vmatmul.mubr.f32.gmra.mxu0 %v483
          %v575 = vpop.f32.mrf.mxu0
          %v576 = vadd.f32 %v507, %v575
          %v577 = vpop.f32.mrf.mxu0
          %578 = vdwg.mxu0
          %v579 = vmul.f32 %v576, 0.5
          %v580 = vmul.f32 %v576, 0.70710677
          %v581 = verf.f32.pop %v580
          %v582 = vadd.f32 %v581, 1.0
          %v583 = vmul.f32 %v579, %v582
          %584 = vadd.xlane.f32.xlu0 %v583
          %v585 = vpop.xlane.xlu0 %584
          %v586 = vrcp.pop 128.0
          %v587 = vmul.f32 %v585, %v586
          %v588 = vsub.f32 %v583, %v587
          %v589 = vmul.f32 %v588, %v588
          %590 = vadd.xlane.f32.xlu0 %v589
          %v591 = vpop.xlane.xlu0 %590
          %v592 = vmul.f32 %v591, %v586
          %v593 = vadd.f32 %v592, 1e-06
          %v594 = vrsqrt.pop %v593
          %v595 = vmul.f32 %v588, %v594
          %v596 = vld [vmem:[%s4] sm:$0x1]
          %v598 = vlaneseq
          %v599 = vshrl.u32 %v598, 7
          %v600 = vsub.s32 0, %v599
          %v601 = vrot.slane %v596, %v600
          %v603 = vmul.f32 %v595, %v601
          %v604 = vld [vmem:[%s5] sm:$0x1]
          %v606 = vlaneseq
          %v607 = vshrl.u32 %v606, 7
          %v608 = vsub.s32 0, %v607
          %v609 = vrot.slane %v604, %v608
          %v611 = vadd.f32 %v603, %v609
          %612 = vst [vmem:[#allocation2] sm:$0xff] %v611
        $region68: #{tpu_custom_call.1} parent=51 // pred_fallthru
          _
        %v613 = vld [vmem:[#allocation2] sm:$0xff]
        %v614 = vld [vmem:[%s348] sm:$0xff]
        %v615 = vld [vmem:[%s348 + $0x8] sm:$0xff]
        %v616 = vld [vmem:[%s348 + $0x10] sm:$0xff]
        %v617 = vld [vmem:[%s348 + $0x18] sm:$0xff]
        %v618 = vld [vmem:[%s348 + $0x20] sm:$0xff]
        %v619 = vld [vmem:[%s348 + $0x28] sm:$0xff]
        %v620 = vld [vmem:[%s348 + $0x30] sm:$0xff]
        %v621 = vld [vmem:[%s348 + $0x38] sm:$0xff]
        %v622 = vld [vmem:[%s348 + $0x40] sm:$0xff]
        %v623 = vld [vmem:[%s348 + $0x48] sm:$0xff]
        %v624 = vld [vmem:[%s348 + $0x50] sm:$0xff]
        %v625 = vld [vmem:[%s348 + $0x58] sm:$0xff]
        %v626 = vld [vmem:[%s348 + $0x60] sm:$0xff]
        %v627 = vld [vmem:[%s348 + $0x68] sm:$0xff]
        %v628 = vld [vmem:[%s348 + $0x70] sm:$0xff]
        %v629 = vld [vmem:[%s348 + $0x78] sm:$0xff]
        %v630 = vld [vmem:[%s394] sm:$0x1]
        %v632 = vlaneseq
        %v633 = vshrl.u32 %v632, 7
        %v634 = vsub.s32 0, %v633
        %v635 = vrot.slane %v630, %v634
        %637 = vmatprep.subr.mxu0 0.0
        %638 = vmatpush1.msra.mxu0 %v629
        %639 = vmatprep.subr.mxu0 0.0
        %640 = vmatpush1.msra.mxu0 %v628
        %641 = vmatprep.subr.mxu0 0.0
        %642 = vmatpush1.msra.mxu0 %v627
        %643 = vmatprep.subr.mxu0 0.0
        %644 = vmatpush1.msra.mxu0 %v626
        %645 = vmatprep.subr.mxu0 0.0
        %646 = vmatpush1.msra.mxu0 %v625
        %647 = vmatprep.subr.mxu0 0.0
        %648 = vmatpush1.msra.mxu0 %v624
        %649 = vmatprep.subr.mxu0 0.0
        %650 = vmatpush1.msra.mxu0 %v623
        %651 = vmatprep.subr.mxu0 0.0
        %652 = vmatpush1.msra.mxu0 %v622
        %653 = vmatprep.subr.mxu0 0.0
        %654 = vmatpush1.msra.mxu0 %v621
        %655 = vmatprep.subr.mxu0 0.0
        %656 = vmatpush1.msra.mxu0 %v620
        %657 = vmatprep.subr.mxu0 0.0
        %658 = vmatpush1.msra.mxu0 %v619
        %659 = vmatprep.subr.mxu0 0.0
        %660 = vmatpush1.msra.mxu0 %v618
        %661 = vmatprep.subr.mxu0 0.0
        %662 = vmatpush1.msra.mxu0 %v617
        %663 = vmatprep.subr.mxu0 0.0
        %664 = vmatpush1.msra.mxu0 %v616
        %665 = vmatprep.subr.mxu0 0.0
        %666 = vmatpush1.msra.mxu0 %v615
        %667 = vmatprep.subr.mxu0 0.0
        %668 = vmatpush1.msra.mxu0 %v614
        %669 = vmatprep.subr.mxu0 0.0
        %670 = vmatpush2.msra.mxu0 0.0
        %671 = vmatprep.subr.mxu0 0.0
        %672 = vmatpush2.msra.mxu0 0.0
        %673 = vmatprep.subr.mxu0 0.0
        %674 = vmatpush2.msra.mxu0 0.0
        %675 = vmatprep.subr.mxu0 0.0
        %676 = vmatpush2.msra.mxu0 0.0
        %677 = vmatprep.subr.mxu0 0.0
        %678 = vmatpush2.msra.mxu0 0.0
        %679 = vmatprep.subr.mxu0 0.0
        %680 = vmatpush2.msra.mxu0 0.0
        %681 = vmatprep.subr.mxu0 0.0
        %682 = vmatpush2.msra.mxu0 0.0
        %683 = vmatprep.subr.mxu0 0.0
        %684 = vmatpush2.msra.mxu0 0.0
        %685 = vmatprep.subr.mxu0 0.0
        %686 = vmatpush2.msra.mxu0 0.0
        %687 = vmatprep.subr.mxu0 0.0
        %688 = vmatpush2.msra.mxu0 0.0
        %689 = vmatprep.subr.mxu0 0.0
        %690 = vmatpush2.msra.mxu0 0.0
        %691 = vmatprep.subr.mxu0 0.0
        %692 = vmatpush2.msra.mxu0 0.0
        %693 = vmatprep.subr.mxu0 0.0
        %694 = vmatpush2.msra.mxu0 0.0
        %695 = vmatprep.subr.mxu0 0.0
        %696 = vmatpush2.msra.mxu0 0.0
        %697 = vmatprep.subr.mxu0 0.0
        %698 = vmatpush2.msra.mxu0 0.0
        %699 = vmatprep.subr.mxu0 0.0
        %700 = vmatpush2.msra.mxu0 0.0
        %701 = vmatprep.mubr.f32.mxu0 0.0
        %702 = vmatmul.mubr.f32.gmra.mxu0 %v613
        %v703 = vpop.f32.mrf.mxu0
        %v704 = vadd.f32 %v635, %v703
        %v705 = vpop.f32.mrf.mxu0
        %706 = vdwg.mxu0
        %707 = vst [vmem:[%s387] sm:$0xff] %v704
        %s708 = sand.u32 %s229, 1
        %s709 = scalar_lea.sflag [#allocation5], %s708
        %s710 = sand.u32 %s229, 1
        %s711 = smul.addr %s710, 8
        %s712 = scalar_lea.vmem [#allocation9], %s711
        // Predicated region
        $region69: #{tpu_custom_call.1} parent=51 // pred_check
          %p713 = pneg %p239
        $region70: #{tpu_custom_call.1} parent=51 // pred_check_branch
          %715 = sbr.rel (%p713) target = $region72
        $region71: #{tpu_custom_call.1} parent=51 // pred_region
          %s717 = ssub.s32 128, 128
          %718 = vsyncadd %s709, %s717
          %s719 = smul.addr %s28, 2
          %s720 = sadd.s32 %s29, %s719
          %s721 = smul.addr %s720, 128
          %s722 = scalar_lea.hbm %s8, %s721
          %s724 = sshll.u32 %s712, 4
          %s725 = int_to_ptr.vmem [resolvable:$true] %s724
          %727 = dma.vmem_to_hbm [thread:$0]  %s725, 128, %s722, %s709
        $region72: #{tpu_custom_call.1} parent=51 // pred_fallthru
          _
      $region52: #{tpu_custom_call.1} parent=5 // pred_fallthru
        _
      %p728 = scmp.le.s32.totalorder 2, %s19
      // Predicated region
      $region73: #{tpu_custom_call.1} parent=5 // pred_check
        %p729 = pneg %p728
      $region74: #{tpu_custom_call.1} parent=5 // pred_check_branch
        %731 = sbr.rel (%p729) target = $region76
      $region75: #{tpu_custom_call.1} parent=5 // pred_region
        %s732 = ssub.s32 %s19, 2
        // Predicated region
        $region77: #{tpu_custom_call.1} parent=75 // pred_check
          %p733 = pneg %p245
        $region78: #{tpu_custom_call.1} parent=75 // pred_check_branch
          %735 = sbr.rel (%p733) target = $region80
        $region79: #{tpu_custom_call.1} parent=75 // pred_region
          %s736 = sand.u32 %s230, 1
          %s737 = scalar_lea.sflag [#allocation5], %s736
          %s738 = sand.u32 %s230, 1
          %s739 = smul.addr %s738, 8
          %s740 = scalar_lea.vmem [#allocation9], %s739
          %741 = dma.done %s737, 128
        $region80: #{tpu_custom_call.1} parent=75 // pred_fallthru
          _
      $region76: #{tpu_custom_call.1} parent=5 // pred_fallthru
        _
    $region6: #{tpu_custom_call.1} parent=1 // loop_footer
      %s23 = sadd.s32 1, %s19
    $region7: #{tpu_custom_call.1} parent=1 // loop_footer_branch
      %18 = sbr.rel target = $region3
    $region8: #{tpu_custom_call.1} parent=1 // loop_exit
      _
    %742 = vsyncpa [#allocation4], 1
    %s743 = scalar_lea.sflag [#allocation4], 1
    %744 = vsyncpa %s743, 1
    %745 = vsyncpa [#allocation7], 1
    %746 = vsyncpa [#allocation5], 1
    %s747 = scalar_lea.sflag [#allocation5], 1
    %748 = vsyncpa %s747, 1

</llo_original>
